<compile_context>
chip_gen: v7x
topology: tpu7x:2x2x1
jax: 0.10.0
libtpu: 0.0.40
codegen_flags: <defaults>
</compile_context>

<pallas_src>
import jax
import jax.numpy as jnp
from jax.experimental import pallas as pl
from jax.experimental.pallas import tpu as pltpu


def _round_up(v: int, m: int) -> int:
    return (v + m - 1) // m * m


def _tpu_vmem_capacity_bytes() -> int:
    """Physical VMEM per core; conservative 64 MiB (v7x) fallback."""
    try:
        return int(pltpu.get_tpu_info().vmem_capacity_bytes)
    except Exception:
        return 64 * 1024 * 1024


def _num_tensorcores() -> int:
    try:
        return max(1, int(getattr(jax.devices()[0], "num_cores", 1)))
    except Exception:
        return 1


def _block_spec(shape, index_map, single_buffer=False):
    """BlockSpec; grid-invariant operands get a single VMEM buffer."""
    if single_buffer and hasattr(pl, "Buffered"):
        try:
            return pl.BlockSpec(shape, index_map, pipeline_mode=pl.Buffered(1))
        except TypeError:
            pass
    return pl.BlockSpec(shape, index_map)


def dense_film_kernel(x_ref, t_ref, wl_ref, wg_ref, wb_ref, bg_ref, bb_ref,
                      o_ref):
    """One (batch, feature) tile of relu((x@Wl) * (t@Wg + bg) + (t@Wb + bb))."""
    cdt = wl_ref.dtype
    x = x_ref[...].astype(cdt)      # in-kernel cast: no wrapper HBM round-trip
    tt = t_ref[...].astype(cdt)

    # MXU matmuls, f32 accumulation.
    h = jnp.dot(x, wl_ref[...], preferred_element_type=jnp.float32)
    gamma = jnp.dot(tt, wg_ref[...],
                    preferred_element_type=jnp.float32) + bg_ref[...]
    beta = jnp.dot(tt, wb_ref[...],
                   preferred_element_type=jnp.float32) + bb_ref[...]

    # FiLM + ReLU on the VPU, lane-dense store.
    o_ref[...] = jnp.maximum(h * gamma + beta, 0.0).astype(o_ref.dtype)


def prepare_dense_layer_params(w_lin, w_gamma, b_gamma, w_beta, b_beta,
                               compute_dtype=jnp.float32):
    """One-time parameter prep (call at init, NOT per forward call).

    w_lin:   [in_neurons, out_neurons]   (nn.Linear weight, pre-transposed)
    w_gamma: [n_time_embedding, out_neurons]
    w_beta:  [n_time_embedding, out_neurons]
    b_gamma, b_beta: [out_neurons] or [1, out_neurons]

    compute_dtype=jnp.bfloat16 is an explicit opt-in fast path (the kernel
    keeps f32 accumulation either way).
    """
    w_lin = jnp.asarray(w_lin)
    w_gamma = jnp.asarray(w_gamma)
    w_beta = jnp.asarray(w_beta)
    out_n = int(w_lin.shape[1])
    out_pad = _round_up(out_n, 128)          # lane-dense stores

    def pad_w(w):
        return jnp.pad(w, ((0, 0), (0, out_pad - out_n))).astype(compute_dtype)

    def pad_b(b):
        b = jnp.asarray(b, dtype=jnp.float32).reshape(1, -1)
        return jnp.pad(b, ((0, 0), (0, out_pad - out_n)))

    return {
        "w_lin": pad_w(w_lin),
        "w_gamma": pad_w(w_gamma),
        "w_beta": pad_w(w_beta),
        "b_gamma": pad_b(b_gamma),
        "b_beta": pad_b(b_beta),
        "out_n": out_n,
        "out_pad": out_pad,
    }


def dense_layer_forward(x, t, params, *, out_dtype=None,
                        block_b_max=512, block_n_max=512):
    """Pallas-backed DenseLayer.forward.

    x: [B, in_neurons], t: [B, n_time_embedding]; params from
    prepare_dense_layer_params(). Returns [B, out_neurons].
    """
    B, in_n = x.shape
    emb = t.shape[1]
    out_n = params["out_n"]
    out_pad = params["out_pad"]
    w_lin, w_gamma, w_beta = params["w_lin"], params["w_gamma"], params["w_beta"]
    b_gamma, b_beta = params["b_gamma"], params["b_beta"]
    assert w_lin.shape[0] == in_n and w_gamma.shape[0] == emb

    out_dtype = x.dtype if out_dtype is None else jnp.dtype(out_dtype)

    # ---- static tiling decisions -------------------------------------------
    mult = 16 if B >= 16 else 8              # sublane multiple for batch tiles
    n_cores = _num_tensorcores()
    if n_cores > 1 and B >= 2 * mult:
        target = pl.cdiv(B, n_cores)         # even work split across TCs
    else:
        target = B                           # single TC: one big tile
    block_b = min(block_b_max, _round_up(target, mult))

    if out_pad <= block_n_max:
        block_n = out_pad                    # single lane-dense N tile
    else:
        block_n = max(256, (block_n_max // 256) * 256)  # fill MXU columns

    # ---- VMEM budget (generation aware) ------------------------------------
    isz_w = w_lin.dtype.itemsize
    isz_x = x.dtype.itemsize
    isz_t = t.dtype.itemsize
    isz_o = jnp.dtype(out_dtype).itemsize

    def vmem_est(bb, bn):
        w_bufs = 1 if pl.cdiv(out_pad, bn) == 1 else 2   # single-buf if invariant
        weights = w_bufs * (in_n + 2 * emb) * bn * isz_w
        biases = w_bufs * 2 * bn * 4
        acts = 2 * bb * (in_n * isz_x + emb * isz_t)     # double-buffered inputs
        outs = 2 * bb * bn * isz_o                       # double-buffered output
        return weights + biases + acts + outs

    capacity = _tpu_vmem_capacity_bytes()
    budget = capacity - 8 * 1024 * 1024
    while vmem_est(block_b, block_n) > budget and block_b > mult:
        block_b = max(mult, _round_up(block_b // 2, mult))
    while vmem_est(block_b, block_n) > budget and block_n > 128:
        block_n = max(128, _round_up(block_n // 2, 128))

    grid_b = pl.cdiv(B, block_b)
    grid_n = pl.cdiv(out_pad, block_n)
    weights_const = grid_n == 1              # weight blocks are grid-invariant

    est = vmem_est(block_b, block_n)
    vmem_limit = None
    if est > 14 * 1024 * 1024:               # below v5e's 16 MiB scoped default
        vmem_limit = int(min(est * 5 // 4 + (2 << 20), capacity - (4 << 20)))

    out_padded = pl.pallas_call(
        dense_film_kernel,
        out_shape=jax.ShapeDtypeStruct((B, out_pad), out_dtype),
        grid_spec=pltpu.PrefetchScalarGridSpec(
            num_scalar_prefetch=0,
            grid=(grid_b, grid_n),           # feature axis innermost
            in_specs=[
                # batch-tiled activations (resident across the inner j sweep)
                pl.BlockSpec((block_b, in_n), lambda i, j: (i, 0)),
                pl.BlockSpec((block_b, emb), lambda i, j: (i, 0)),
                # feature-tiled weights / biases
                _block_spec((in_n, block_n), lambda i, j: (0, j), weights_const),
                _block_spec((emb, block_n), lambda i, j: (0, j), weights_const),
                _block_spec((emb, block_n), lambda i, j: (0, j), weights_const),
                _block_spec((1, block_n), lambda i, j: (0, j), weights_const),
                _block_spec((1, block_n), lambda i, j: (0, j), weights_const),
            ],
            out_specs=pl.BlockSpec((block_b, block_n), lambda i, j: (i, j)),
        ),
        compiler_params=pltpu.CompilerParams(
            dimension_semantics=("parallel", "parallel"),
            vmem_limit_bytes=vmem_limit),
    )(x, t, w_lin, w_gamma, w_beta, b_gamma, b_beta)

    if out_pad == out_n:
        return out_padded                    # no trailing-copy slice needed
    return out_padded[:, :out_n]


def reference_forward(x, t, w_lin, w_gamma, b_gamma, w_beta, b_beta):
    h = x @ w_lin
    gamma = t @ w_gamma + jnp.reshape(b_gamma, (1, -1))
    beta = t @ w_beta + jnp.reshape(b_beta, (1, -1))
    return jnp.maximum(h * gamma + beta, 0.0)


if __name__ == "__main__":
    # Small shapes consistent with the module.
    B = 8
    in_neurons = 32
    out_neurons = 64
    n_time_embedding = 128

    key = jax.random.PRNGKey(0)
    kx, kt, k1, k2, k3, k4, k5 = jax.random.split(key, 7)

    x = jax.random.normal(kx, (B, in_neurons), dtype=jnp.float32)
    t = jax.random.normal(kt, (B, n_time_embedding), dtype=jnp.float32)

    # Parameters stored pre-transposed ([in, out]); biases torch-style 1-D.
    w_lin = jax.random.normal(k1, (in_neurons, out_neurons),
                              dtype=jnp.float32) * (1.0 / in_neurons ** 0.5)
    w_gamma = jax.random.normal(k2, (n_time_embedding, out_neurons),
                                dtype=jnp.float32) * (1.0 / n_time_embedding ** 0.5)
    b_gamma = jax.random.normal(k3, (out_neurons,), dtype=jnp.float32) * 0.1
    w_beta = jax.random.normal(k4, (n_time_embedding, out_neurons),
                               dtype=jnp.float32) * (1.0 / n_time_embedding ** 0.5)
    b_beta = jax.random.normal(k5, (out_neurons,), dtype=jnp.float32) * 0.1

    ref = reference_forward(x, t, w_lin, w_gamma, b_gamma, w_beta, b_beta)

    # Exact path: f32 compute (default), f32 output — matches PyTorch numerics.
    params_f32 = prepare_dense_layer_params(w_lin, w_gamma, b_gamma,
                                            w_beta, b_beta)
    fwd_f32 = jax.jit(lambda a, b: dense_layer_forward(a, b, params_f32))
    out_f32 = jax.block_until_ready(fwd_f32(x, t))
    assert out_f32.shape == (B, out_neurons)
    assert jnp.allclose(out_f32, ref, atol=1e-5, rtol=1e-5), \
        "f32 kernel mismatch vs reference"

    # Opt-in fast path: bf16 weights/compute + bf16 output, f32 accumulation.
    params_bf16 = prepare_dense_layer_params(w_lin, w_gamma, b_gamma,
                                             w_beta, b_beta,
                                             compute_dtype=jnp.bfloat16)
    fwd_bf16 = jax.jit(lambda a, b: dense_layer_forward(
        a, b, params_bf16, out_dtype=jnp.bfloat16))
    out_bf16 = jax.block_until_ready(fwd_bf16(x, t))
    assert out_bf16.shape == (B, out_neurons)
    assert out_bf16.dtype == jnp.bfloat16
    assert jnp.allclose(out_bf16.astype(jnp.float32), ref,
                        atol=1e-1, rtol=1e-1), \
        "bf16 kernel mismatch vs reference"

    print("KERNEL_OK")
</pallas_src>

<mosaic_0001>
module attributes {stable_mosaic.version = 11 : i64} {
  func.func @dense_film_kernel(%arg0: i32, %arg1: i32, %arg2: memref<8x32xf32, #tpu.memory_space<vmem>>, %arg3: memref<8x128xf32, #tpu.memory_space<vmem>>, %arg4: memref<32x128xf32, #tpu.memory_space<vmem>>, %arg5: memref<128x128xf32, #tpu.memory_space<vmem>>, %arg6: memref<128x128xf32, #tpu.memory_space<vmem>>, %arg7: memref<1x128xf32, #tpu.memory_space<vmem>>, %arg8: memref<1x128xf32, #tpu.memory_space<vmem>>, %arg9: memref<8x128xf32, #tpu.memory_space<vmem>>) attributes {dimension_semantics = [#tpu.dimension_semantics<parallel>, #tpu.dimension_semantics<parallel>], iteration_bounds = array<i64: 1, 1>, scalar_prefetch = 0 : i64, scratch_operands = 0 : i64, tpu.core_type = #tpu.core_type<tc>, window_params = [{transform_indices = @transform_0, window_bounds = array<i64: 8, 32>}, {transform_indices = @transform_1, window_bounds = array<i64: 8, 128>}, {pipeline_mode = #tpu.pipeline_mode<synchronous>, transform_indices = @transform_2, window_bounds = array<i64: 32, 128>}, {pipeline_mode = #tpu.pipeline_mode<synchronous>, transform_indices = @transform_3, window_bounds = array<i64: 128, 128>}, {pipeline_mode = #tpu.pipeline_mode<synchronous>, transform_indices = @transform_4, window_bounds = array<i64: 128, 128>}, {pipeline_mode = #tpu.pipeline_mode<synchronous>, transform_indices = @transform_5, window_bounds = array<i64: 1, 128>}, {pipeline_mode = #tpu.pipeline_mode<synchronous>, transform_indices = @transform_6, window_bounds = array<i64: 1, 128>}, {transform_indices = @transform_7, window_bounds = array<i64: 8, 128>}]} {
    %c0 = arith.constant 0 : index
    %c0_0 = arith.constant 0 : index
    %0 = vector.load %arg2[%c0, %c0_0] : memref<8x32xf32, #tpu.memory_space<vmem>>, vector<8x32xf32>
    %c0_1 = arith.constant 0 : index
    %c0_2 = arith.constant 0 : index
    %1 = vector.load %arg3[%c0_1, %c0_2] : memref<8x128xf32, #tpu.memory_space<vmem>>, vector<8x128xf32>
    %c0_3 = arith.constant 0 : index
    %c0_4 = arith.constant 0 : index
    %2 = vector.load %arg4[%c0_3, %c0_4] : memref<32x128xf32, #tpu.memory_space<vmem>>, vector<32x128xf32>
    %cst = arith.constant dense<0.000000e+00> : vector<8x128xf32>
    %3 = tpu.matmul %0, %2, %cst {dimension_numbers = #tpu.dot_dimension_numbers<[1], [0], [0], [1], [0, 0, 1, 1], [], []>} : vector<8x32xf32>, vector<32x128xf32>, vector<8x128xf32> -> vector<8x128xf32>
    %c0_5 = arith.constant 0 : index
    %c0_6 = arith.constant 0 : index
    %4 = vector.load %arg5[%c0_5, %c0_6] : memref<128x128xf32, #tpu.memory_space<vmem>>, vector<128x128xf32>
    %cst_7 = arith.constant dense<0.000000e+00> : vector<8x128xf32>
    %5 = tpu.matmul %1, %4, %cst_7 {dimension_numbers = #tpu.dot_dimension_numbers<[1], [0], [0], [1], [0, 0, 1, 1], [], []>} : vector<8x128xf32>, vector<128x128xf32>, vector<8x128xf32> -> vector<8x128xf32>
    %c0_8 = arith.constant 0 : index
    %c0_9 = arith.constant 0 : index
    %6 = vector.load %arg7[%c0_8, %c0_9] : memref<1x128xf32, #tpu.memory_space<vmem>>, vector<1x128xf32>
    %7 = vector.broadcast %6 : vector<1x128xf32> to vector<8x128xf32>
    %8 = arith.addf %5, %7 : vector<8x128xf32>
    %c0_10 = arith.constant 0 : index
    %c0_11 = arith.constant 0 : index
    %9 = vector.load %arg6[%c0_10, %c0_11] : memref<128x128xf32, #tpu.memory_space<vmem>>, vector<128x128xf32>
    %cst_12 = arith.constant dense<0.000000e+00> : vector<8x128xf32>
    %10 = tpu.matmul %1, %9, %cst_12 {dimension_numbers = #tpu.dot_dimension_numbers<[1], [0], [0], [1], [0, 0, 1, 1], [], []>} : vector<8x128xf32>, vector<128x128xf32>, vector<8x128xf32> -> vector<8x128xf32>
    %c0_13 = arith.constant 0 : index
    %c0_14 = arith.constant 0 : index
    %11 = vector.load %arg8[%c0_13, %c0_14] : memref<1x128xf32, #tpu.memory_space<vmem>>, vector<1x128xf32>
    %12 = vector.broadcast %11 : vector<1x128xf32> to vector<8x128xf32>
    %13 = arith.addf %10, %12 : vector<8x128xf32>
    %14 = arith.mulf %3, %8 : vector<8x128xf32>
    %15 = arith.addf %14, %13 : vector<8x128xf32>
    %cst_15 = arith.constant 0.000000e+00 : f32
    %16 = vector.broadcast %cst_15 : f32 to vector<8x128xf32>
    %17 = arith.maximumf %15, %16 : vector<8x128xf32>
    %c0_16 = arith.constant 0 : index
    %c0_17 = arith.constant 0 : index
    %18 = vector.load %arg9[%c0_16, %c0_17] : memref<8x128xf32, #tpu.memory_space<vmem>>, vector<8x128xf32>
    tpu.vector_store %arg9[%c0_16, %c0_17], %17 {strides = array<i32>} : memref<8x128xf32, #tpu.memory_space<vmem>>, vector<8x128xf32>,
    return
  }
  func.func @transform_0(%arg0: i32, %arg1: i32) -> (i32, i32) {
    %c0_i32 = arith.constant 0 : i32
    %c0_i32_0 = arith.constant 0 : i32
    return %arg0, %c0_i32 : i32, i32
  }
  func.func @transform_1(%arg0: i32, %arg1: i32) -> (i32, i32) {
    %c0_i32 = arith.constant 0 : i32
    %c0_i32_0 = arith.constant 0 : i32
    return %arg0, %c0_i32 : i32, i32
  }
  func.func @transform_2(%arg0: i32, %arg1: i32) -> (i32, i32) {
    %c0_i32 = arith.constant 0 : i32
    %c0_i32_0 = arith.constant 0 : i32
    return %c0_i32, %arg1 : i32, i32
  }
  func.func @transform_3(%arg0: i32, %arg1: i32) -> (i32, i32) {
    %c0_i32 = arith.constant 0 : i32
    %c0_i32_0 = arith.constant 0 : i32
    return %c0_i32, %arg1 : i32, i32
  }
  func.func @transform_4(%arg0: i32, %arg1: i32) -> (i32, i32) {
    %c0_i32 = arith.constant 0 : i32
    %c0_i32_0 = arith.constant 0 : i32
    return %c0_i32, %arg1 : i32, i32
  }
  func.func @transform_5(%arg0: i32, %arg1: i32) -> (i32, i32) {
    %c0_i32 = arith.constant 0 : i32
    %c0_i32_0 = arith.constant 0 : i32
    return %c0_i32, %arg1 : i32, i32
  }
  func.func @transform_6(%arg0: i32, %arg1: i32) -> (i32, i32) {
    %c0_i32 = arith.constant 0 : i32
    %c0_i32_0 = arith.constant 0 : i32
    return %c0_i32, %arg1 : i32, i32
  }
  func.func @transform_7(%arg0: i32, %arg1: i32) -> (i32, i32) {
    %c0_i32 = arith.constant 0 : i32
    return %arg0, %arg1 : i32, i32
  }
}

</mosaic_0001>

<llo_original>
// kernel: _lambda_.1
$region0: #{_lambda_.1}
  #allocation0 [shape = 'u32[]', space=smem, size = 0x4, offset = 0x4, fixed_abs, tag = 'smem constant byte address 0x4 - core index']
  #allocation1 [shape = 'u32[144,128]{1,0:T(1,128)}', space=vmem, size = 0x12000, scoped, tag = 'internal scratch']
  %s0 = inlined_call_operand.hbm [shape: f32[8,32], index: 0, kind: input, shape index: {}]
  %s1 = inlined_call_operand.hbm [shape: f32[8,128], index: 1, kind: input, shape index: {}]
  %s2 = inlined_call_operand.hbm [shape: f32[32,128], index: 2, kind: input, shape index: {}]
  %s3 = inlined_call_operand.hbm [shape: f32[128,128], index: 3, kind: input, shape index: {}]
  %s4 = inlined_call_operand.hbm [shape: f32[128,128], index: 4, kind: input, shape index: {}]
  %s5 = inlined_call_operand.vmem [shape: f32[1,128], index: 5, kind: input, shape index: {}]
  %s6 = inlined_call_operand.vmem [shape: f32[1,128], index: 6, kind: input, shape index: {}]
  %s7 = inlined_call_operand.hbm [shape: f32[8,128], index: 7, kind: output, shape index: {}]
  %s8 = sld [smem:[#allocation0]]
  $region58: #{_lambda_.1} parent=0
    _
  %s10 = ssub.s32 1, %s8
  %s11 = scalar_select 0, %s10, %s8
  $region1: #{_lambda_.1} parent=0
    #allocation2 [shape = 'u8[4096]{0}', space=vmem, size = 0x1000, scoped, tag = 'input window, operand 0, single buffered']
    #allocation3 [shape = 's32[1]{0}', space=sflag, size = 0x4, scoped, tag = 'scoped memory for _lambda_.1']
    #allocation4 [shape = 's32[1]{0}', space=sflag, size = 0x4, scoped, tag = 'scoped memory for _lambda_.1']
    #allocation5 [shape = 'u8[4096]{0}', space=vmem, size = 0x1000, scoped, tag = 'input window, operand 1, single buffered']
    #allocation6 [shape = 's32[1]{0}', space=sflag, size = 0x4, scoped, tag = 'scoped memory for _lambda_.1']
    #allocation7 [shape = 'u8[16384]{0}', space=vmem, size = 0x4000, scoped, tag = 'input window, operand 2, single buffered']
    #allocation8 [shape = 'u8[65536]{0}', space=vmem, size = 0x10000, scoped, tag = 'input window, operand 3, single buffered']
    #allocation9 [shape = 's32[1]{0}', space=sflag, size = 0x4, scoped, tag = 'scoped memory for _lambda_.1']
    #allocation10 [shape = 'u8[65536]{0}', space=vmem, size = 0x10000, scoped, tag = 'input window, operand 4, single buffered']
    #allocation11 [shape = 'u8[4096]{0}', space=vmem, size = 0x1000, scoped, tag = 'output window, operand 0, single buffered']
    %12 = vsyncpa [#allocation3], 0
    %13 = vsyncpa [#allocation6], 0
    %14 = vsyncpa [#allocation9], 0
    %15 = vsyncpa [#allocation4], 0
    // Predicated region
    $region2: #{_lambda_.1} parent=1 // pred_check
      _
    $region3: #{_lambda_.1} parent=1 // pred_check_branch
      %17 = sbr.rel (0) target = $region5
    $region4: #{_lambda_.1} parent=1 // pred_region
      %s19 = ssub.s32 128, 128
      %20 = vsyncadd [#allocation3], %s19
      %s22 = sshll.u32 [#allocation2], 4
      %s23 = int_to_ptr.vmem [resolvable:$true] %s22
      %25 = dma.hbm_to_vmem [thread:$0]  %s0, 128, %s23, [#allocation3]
    $region5: #{_lambda_.1} parent=1 // pred_fallthru
      _
    // Predicated region
    $region6: #{_lambda_.1} parent=1 // pred_check
      _
    $region7: #{_lambda_.1} parent=1 // pred_check_branch
      %27 = sbr.rel (0) target = $region9
    $region8: #{_lambda_.1} parent=1 // pred_region
      %s29 = ssub.s32 128, 128
      %30 = vsyncadd [#allocation6], %s29
      %s32 = sshll.u32 [#allocation5], 4
      %s33 = int_to_ptr.vmem [resolvable:$true] %s32
      %35 = dma.hbm_to_vmem [thread:$0]  %s1, 128, %s33, [#allocation6]
    $region9: #{_lambda_.1} parent=1 // pred_fallthru
      _
    // Predicated region
    $region10: #{_lambda_.1} parent=1 // pred_check
      _
    $region11: #{_lambda_.1} parent=1 // pred_check_branch
      %37 = sbr.rel (0) target = $region13
    $region12: #{_lambda_.1} parent=1 // pred_region
      %s39 = ssub.s32 512, 512
      %40 = vsyncadd [#allocation6], %s39
      %s41 = sshll.u32 [#allocation7], 4
      %s42 = int_to_ptr.vmem [resolvable:$true] %s41
      %47 = dma.hbm_to_vmem [thread:$0]  %s2, 512, %s42, [#allocation6], 128, 128, 8
    $region13: #{_lambda_.1} parent=1 // pred_fallthru
      _
    // Predicated region
    $region14: #{_lambda_.1} parent=1 // pred_check
      _
    $region15: #{_lambda_.1} parent=1 // pred_check_branch
      %49 = sbr.rel (0) target = $region17
    $region16: #{_lambda_.1} parent=1 // pred_region
      %s51 = ssub.s32 2048, 2048
      %52 = vsyncadd [#allocation9], %s51
      %s53 = sshll.u32 [#allocation8], 4
      %s54 = int_to_ptr.vmem [resolvable:$true] %s53
      %59 = dma.hbm_to_vmem [thread:$0]  %s3, 2048, %s54, [#allocation9], 128, 128, 8
    $region17: #{_lambda_.1} parent=1 // pred_fallthru
      _
    // Predicated region
    $region18: #{_lambda_.1} parent=1 // pred_check
      _
    $region19: #{_lambda_.1} parent=1 // pred_check_branch
      %61 = sbr.rel (0) target = $region21
    $region20: #{_lambda_.1} parent=1 // pred_region
      %s63 = ssub.s32 2048, 2048
      %64 = vsyncadd [#allocation9], %s63
      %s65 = sshll.u32 [#allocation10], 4
      %s66 = int_to_ptr.vmem [resolvable:$true] %s65
      %71 = dma.hbm_to_vmem [thread:$0]  %s4, 2048, %s66, [#allocation9], 128, 128, 8
    $region21: #{_lambda_.1} parent=1 // pred_fallthru
      _
    // Predicated region
    $region22: #{_lambda_.1} parent=1 // pred_check
      _
    $region23: #{_lambda_.1} parent=1 // pred_check_branch
      %73 = sbr.rel (0) target = $region25
    $region24: #{_lambda_.1} parent=1 // pred_region
      _
    $region25: #{_lambda_.1} parent=1 // pred_fallthru
      _
    // Predicated region
    $region26: #{_lambda_.1} parent=1 // pred_check
      _
    $region27: #{_lambda_.1} parent=1 // pred_check_branch
      %75 = sbr.rel (0) target = $region29
    $region28: #{_lambda_.1} parent=1 // pred_region
      _
    $region29: #{_lambda_.1} parent=1 // pred_fallthru
      _
    // Predicated region
    $region30: #{_lambda_.1} parent=1 // pred_check
      _
    $region31: #{_lambda_.1} parent=1 // pred_check_branch
      %77 = sbr.rel (0) target = $region33
    $region32: #{_lambda_.1} parent=1 // pred_region
      %78 = dma.done [#allocation3], 128
    $region33: #{_lambda_.1} parent=1 // pred_fallthru
      _
    // Predicated region
    $region34: #{_lambda_.1} parent=1 // pred_check
      _
    $region35: #{_lambda_.1} parent=1 // pred_check_branch
      %80 = sbr.rel (0) target = $region37
    $region36: #{_lambda_.1} parent=1 // pred_region
      %81 = dma.done [#allocation6], 128
    $region37: #{_lambda_.1} parent=1 // pred_fallthru
      _
    // Predicated region
    $region38: #{_lambda_.1} parent=1 // pred_check
      _
    $region39: #{_lambda_.1} parent=1 // pred_check_branch
      %83 = sbr.rel (0) target = $region41
    $region40: #{_lambda_.1} parent=1 // pred_region
      %84 = dma.done [#allocation6], 512
    $region41: #{_lambda_.1} parent=1 // pred_fallthru
      _
    // Predicated region
    $region42: #{_lambda_.1} parent=1 // pred_check
      _
    $region43: #{_lambda_.1} parent=1 // pred_check_branch
      %86 = sbr.rel (0) target = $region45
    $region44: #{_lambda_.1} parent=1 // pred_region
      %87 = dma.done [#allocation9], 2048
    $region45: #{_lambda_.1} parent=1 // pred_fallthru
      _
    // Predicated region
    $region46: #{_lambda_.1} parent=1 // pred_check
      _
    $region47: #{_lambda_.1} parent=1 // pred_check_branch
      %89 = sbr.rel (0) target = $region49
    $region48: #{_lambda_.1} parent=1 // pred_region
      %90 = dma.done [#allocation9], 2048
    $region49: #{_lambda_.1} parent=1 // pred_fallthru
      _
    %v91 = vld [vmem:[#allocation2] sm:$0xff]
    %v92 = vld [vmem:[#allocation5] sm:$0xff]
    %v93 = vld [vmem:[#allocation7] sm:$0xff]
    %v94 = vld [vmem:[#allocation7 + $0x8] sm:$0xff]
    %v95 = vld [vmem:[#allocation7 + $0x10] sm:$0xff]
    %v96 = vld [vmem:[#allocation7 + $0x18] sm:$0xff]
    %vm97 = vcmask 261120
    %v99 = vsel %vm97, %v91, 0
    %101 = vmatprep.subr.mxu0 0.0
    %102 = vmatpush1.msra.mxu0 %v93
    %103 = vmatprep.subr.mxu0 0.0
    %104 = vmatpush1.msra.mxu0 %v94
    %105 = vmatprep.subr.mxu0 0.0
    %106 = vmatpush1.msra.mxu0 %v95
    %107 = vmatprep.subr.mxu0 0.0
    %108 = vmatpush1.msra.mxu0 %v96
    %109 = vmatprep.subr.mxu0 0.0
    %110 = vmatpush1.msra.mxu0 0.0
    %111 = vmatprep.subr.mxu0 0.0
    %112 = vmatpush1.msra.mxu0 0.0
    %113 = vmatprep.subr.mxu0 0.0
    %114 = vmatpush1.msra.mxu0 0.0
    %115 = vmatprep.subr.mxu0 0.0
    %116 = vmatpush1.msra.mxu0 0.0
    %117 = vmatprep.subr.mxu0 0.0
    %118 = vmatpush1.msra.mxu0 0.0
    %119 = vmatprep.subr.mxu0 0.0
    %120 = vmatpush1.msra.mxu0 0.0
    %121 = vmatprep.subr.mxu0 0.0
    %122 = vmatpush1.msra.mxu0 0.0
    %123 = vmatprep.subr.mxu0 0.0
    %124 = vmatpush1.msra.mxu0 0.0
    %125 = vmatprep.subr.mxu0 0.0
    %126 = vmatpush1.msra.mxu0 0.0
    %127 = vmatprep.subr.mxu0 0.0
    %128 = vmatpush1.msra.mxu0 0.0
    %129 = vmatprep.subr.mxu0 0.0
    %130 = vmatpush1.msra.mxu0 0.0
    %131 = vmatprep.subr.mxu0 0.0
    %132 = vmatpush1.msra.mxu0 0.0
    %133 = vmatprep.subr.mxu0 0.0
    %134 = vmatpush1.msra.mxu0 0.0
    %135 = vmatprep.subr.mxu0 0.0
    %136 = vmatpush1.msra.mxu0 0.0
    %137 = vmatprep.subr.mxu0 0.0
    %138 = vmatpush1.msra.mxu0 0.0
    %139 = vmatprep.subr.mxu0 0.0
    %140 = vmatpush1.msra.mxu0 0.0
    %141 = vmatprep.subr.mxu0 0.0
    %142 = vmatpush1.msra.mxu0 0.0
    %143 = vmatprep.subr.mxu0 0.0
    %144 = vmatpush1.msra.mxu0 0.0
    %145 = vmatprep.subr.mxu0 0.0
    %146 = vmatpush1.msra.mxu0 0.0
    %147 = vmatprep.subr.mxu0 0.0
    %148 = vmatpush1.msra.mxu0 0.0
    %149 = vmatprep.subr.mxu0 0.0
    %150 = vmatpush1.msra.mxu0 0.0
    %151 = vmatprep.subr.mxu0 0.0
    %152 = vmatpush1.msra.mxu0 0.0
    %153 = vmatprep.subr.mxu0 0.0
    %154 = vmatpush1.msra.mxu0 0.0
    %155 = vmatprep.subr.mxu0 0.0
    %156 = vmatpush1.msra.mxu0 0.0
    %157 = vmatprep.subr.mxu0 0.0
    %158 = vmatpush1.msra.mxu0 0.0
    %159 = vmatprep.subr.mxu0 0.0
    %160 = vmatpush1.msra.mxu0 0.0
    %161 = vmatprep.subr.mxu0 0.0
    %162 = vmatpush1.msra.mxu0 0.0
    %163 = vmatprep.subr.mxu0 0.0
    %164 = vmatpush1.msra.mxu0 0.0
    %165 = vmatprep.mubr.f32.mxu0 0.0
    %166 = vmatmul.mubr.f32.gmra.mrb[0].mxu0 %v99
    %v167 = vpop.f32.mrb[0].mxu0
    %v168 = vadd.f32 0.0, %v167
    %v169 = vpop.f32.mrb[0].mxu0
    %170 = vdwg.mxu0
    %v171 = vld [vmem:[#allocation8] sm:$0xff]
    %v172 = vld [vmem:[#allocation8 + $0x8] sm:$0xff]
    %v173 = vld [vmem:[#allocation8 + $0x10] sm:$0xff]
    %v174 = vld [vmem:[#allocation8 + $0x18] sm:$0xff]
    %v175 = vld [vmem:[#allocation8 + $0x20] sm:$0xff]
    %v176 = vld [vmem:[#allocation8 + $0x28] sm:$0xff]
    %v177 = vld [vmem:[#allocation8 + $0x30] sm:$0xff]
    %v178 = vld [vmem:[#allocation8 + $0x38] sm:$0xff]
    %v179 = vld [vmem:[#allocation8 + $0x40] sm:$0xff]
    %v180 = vld [vmem:[#allocation8 + $0x48] sm:$0xff]
    %v181 = vld [vmem:[#allocation8 + $0x50] sm:$0xff]
    %v182 = vld [vmem:[#allocation8 + $0x58] sm:$0xff]
    %v183 = vld [vmem:[#allocation8 + $0x60] sm:$0xff]
    %v184 = vld [vmem:[#allocation8 + $0x68] sm:$0xff]
    %v185 = vld [vmem:[#allocation8 + $0x70] sm:$0xff]
    %v186 = vld [vmem:[#allocation8 + $0x78] sm:$0xff]
    %v187 = vld [vmem:[%s5] sm:$0x1]
    %v189 = vlaneseq
    %v190 = vshrl.u32 %v189, 7
    %v191 = vsub.s32 0, %v190
    %v192 = vrot.slane %v187, %v191
    %194 = vmatprep.subr.mxu0 0.0
    %195 = vmatpush1.msra.mxu0 %v171
    %196 = vmatprep.subr.mxu0 0.0
    %197 = vmatpush1.msra.mxu0 %v172
    %198 = vmatprep.subr.mxu0 0.0
    %199 = vmatpush1.msra.mxu0 %v173
    %200 = vmatprep.subr.mxu0 0.0
    %201 = vmatpush1.msra.mxu0 %v174
    %202 = vmatprep.subr.mxu0 0.0
    %203 = vmatpush1.msra.mxu0 %v175
    %204 = vmatprep.subr.mxu0 0.0
    %205 = vmatpush1.msra.mxu0 %v176
    %206 = vmatprep.subr.mxu0 0.0
    %207 = vmatpush1.msra.mxu0 %v177
    %208 = vmatprep.subr.mxu0 0.0
    %209 = vmatpush1.msra.mxu0 %v178
    %210 = vmatprep.subr.mxu0 0.0
    %211 = vmatpush1.msra.mxu0 %v179
    %212 = vmatprep.subr.mxu0 0.0
    %213 = vmatpush1.msra.mxu0 %v180
    %214 = vmatprep.subr.mxu0 0.0
    %215 = vmatpush1.msra.mxu0 %v181
    %216 = vmatprep.subr.mxu0 0.0
    %217 = vmatpush1.msra.mxu0 %v182
    %218 = vmatprep.subr.mxu0 0.0
    %219 = vmatpush1.msra.mxu0 %v183
    %220 = vmatprep.subr.mxu0 0.0
    %221 = vmatpush1.msra.mxu0 %v184
    %222 = vmatprep.subr.mxu0 0.0
    %223 = vmatpush1.msra.mxu0 %v185
    %224 = vmatprep.subr.mxu0 0.0
    %225 = vmatpush1.msra.mxu0 %v186
    %226 = vmatprep.subr.mxu0 0.0
    %227 = vmatpush1.msra.mxu0 0.0
    %228 = vmatprep.subr.mxu0 0.0
    %229 = vmatpush1.msra.mxu0 0.0
    %230 = vmatprep.subr.mxu0 0.0
    %231 = vmatpush1.msra.mxu0 0.0
    %232 = vmatprep.subr.mxu0 0.0
    %233 = vmatpush1.msra.mxu0 0.0
    %234 = vmatprep.subr.mxu0 0.0
    %235 = vmatpush1.msra.mxu0 0.0
    %236 = vmatprep.subr.mxu0 0.0
    %237 = vmatpush1.msra.mxu0 0.0
    %238 = vmatprep.subr.mxu0 0.0
    %239 = vmatpush1.msra.mxu0 0.0
    %240 = vmatprep.subr.mxu0 0.0
    %241 = vmatpush1.msra.mxu0 0.0
    %242 = vmatprep.subr.mxu0 0.0
    %243 = vmatpush1.msra.mxu0 0.0
    %244 = vmatprep.subr.mxu0 0.0
    %245 = vmatpush1.msra.mxu0 0.0
    %246 = vmatprep.subr.mxu0 0.0
    %247 = vmatpush1.msra.mxu0 0.0
    %248 = vmatprep.subr.mxu0 0.0
    %249 = vmatpush1.msra.mxu0 0.0
    %250 = vmatprep.subr.mxu0 0.0
    %251 = vmatpush1.msra.mxu0 0.0
    %252 = vmatprep.subr.mxu0 0.0
    %253 = vmatpush1.msra.mxu0 0.0
    %254 = vmatprep.subr.mxu0 0.0
    %255 = vmatpush1.msra.mxu0 0.0
    %256 = vmatprep.subr.mxu0 0.0
    %257 = vmatpush1.msra.mxu0 0.0
    %258 = vmatprep.mubr.f32.mxu0 0.0
    %259 = vmatmul.mubr.f32.gmra.mrb[0].mxu0 %v92
    %v260 = vpop.f32.mrb[0].mxu0
    %v261 = vadd.f32 %v192, %v260
    %v262 = vpop.f32.mrb[0].mxu0
    %263 = vdwg.mxu0
    %v264 = vld [vmem:[#allocation10] sm:$0xff]
    %v265 = vld [vmem:[#allocation10 + $0x8] sm:$0xff]
    %v266 = vld [vmem:[#allocation10 + $0x10] sm:$0xff]
    %v267 = vld [vmem:[#allocation10 + $0x18] sm:$0xff]
    %v268 = vld [vmem:[#allocation10 + $0x20] sm:$0xff]
    %v269 = vld [vmem:[#allocation10 + $0x28] sm:$0xff]
    %v270 = vld [vmem:[#allocation10 + $0x30] sm:$0xff]
    %v271 = vld [vmem:[#allocation10 + $0x38] sm:$0xff]
    %v272 = vld [vmem:[#allocation10 + $0x40] sm:$0xff]
    %v273 = vld [vmem:[#allocation10 + $0x48] sm:$0xff]
    %v274 = vld [vmem:[#allocation10 + $0x50] sm:$0xff]
    %v275 = vld [vmem:[#allocation10 + $0x58] sm:$0xff]
    %v276 = vld [vmem:[#allocation10 + $0x60] sm:$0xff]
    %v277 = vld [vmem:[#allocation10 + $0x68] sm:$0xff]
    %v278 = vld [vmem:[#allocation10 + $0x70] sm:$0xff]
    %v279 = vld [vmem:[#allocation10 + $0x78] sm:$0xff]
    %v280 = vld [vmem:[%s6] sm:$0x1]
    %v282 = vlaneseq
    %v283 = vshrl.u32 %v282, 7
    %v284 = vsub.s32 0, %v283
    %v285 = vrot.slane %v280, %v284
    %287 = vmatprep.subr.mxu0 0.0
    %288 = vmatpush1.msra.mxu0 %v264
    %289 = vmatprep.subr.mxu0 0.0
    %290 = vmatpush1.msra.mxu0 %v265
    %291 = vmatprep.subr.mxu0 0.0
    %292 = vmatpush1.msra.mxu0 %v266
    %293 = vmatprep.subr.mxu0 0.0
    %294 = vmatpush1.msra.mxu0 %v267
    %295 = vmatprep.subr.mxu0 0.0
    %296 = vmatpush1.msra.mxu0 %v268
    %297 = vmatprep.subr.mxu0 0.0
    %298 = vmatpush1.msra.mxu0 %v269
    %299 = vmatprep.subr.mxu0 0.0
    %300 = vmatpush1.msra.mxu0 %v270
    %301 = vmatprep.subr.mxu0 0.0
    %302 = vmatpush1.msra.mxu0 %v271
    %303 = vmatprep.subr.mxu0 0.0
    %304 = vmatpush1.msra.mxu0 %v272
    %305 = vmatprep.subr.mxu0 0.0
    %306 = vmatpush1.msra.mxu0 %v273
    %307 = vmatprep.subr.mxu0 0.0
    %308 = vmatpush1.msra.mxu0 %v274
    %309 = vmatprep.subr.mxu0 0.0
    %310 = vmatpush1.msra.mxu0 %v275
    %311 = vmatprep.subr.mxu0 0.0
    %312 = vmatpush1.msra.mxu0 %v276
    %313 = vmatprep.subr.mxu0 0.0
    %314 = vmatpush1.msra.mxu0 %v277
    %315 = vmatprep.subr.mxu0 0.0
    %316 = vmatpush1.msra.mxu0 %v278
    %317 = vmatprep.subr.mxu0 0.0
    %318 = vmatpush1.msra.mxu0 %v279
    %319 = vmatprep.subr.mxu0 0.0
    %320 = vmatpush1.msra.mxu0 0.0
    %321 = vmatprep.subr.mxu0 0.0
    %322 = vmatpush1.msra.mxu0 0.0
    %323 = vmatprep.subr.mxu0 0.0
    %324 = vmatpush1.msra.mxu0 0.0
    %325 = vmatprep.subr.mxu0 0.0
    %326 = vmatpush1.msra.mxu0 0.0
    %327 = vmatprep.subr.mxu0 0.0
    %328 = vmatpush1.msra.mxu0 0.0
    %329 = vmatprep.subr.mxu0 0.0
    %330 = vmatpush1.msra.mxu0 0.0
    %331 = vmatprep.subr.mxu0 0.0
    %332 = vmatpush1.msra.mxu0 0.0
    %333 = vmatprep.subr.mxu0 0.0
    %334 = vmatpush1.msra.mxu0 0.0
    %335 = vmatprep.subr.mxu0 0.0
    %336 = vmatpush1.msra.mxu0 0.0
    %337 = vmatprep.subr.mxu0 0.0
    %338 = vmatpush1.msra.mxu0 0.0
    %339 = vmatprep.subr.mxu0 0.0
    %340 = vmatpush1.msra.mxu0 0.0
    %341 = vmatprep.subr.mxu0 0.0
    %342 = vmatpush1.msra.mxu0 0.0
    %343 = vmatprep.subr.mxu0 0.0
    %344 = vmatpush1.msra.mxu0 0.0
    %345 = vmatprep.subr.mxu0 0.0
    %346 = vmatpush1.msra.mxu0 0.0
    %347 = vmatprep.subr.mxu0 0.0
    %348 = vmatpush1.msra.mxu0 0.0
    %349 = vmatprep.subr.mxu0 0.0
    %350 = vmatpush1.msra.mxu0 0.0
    %351 = vmatprep.mubr.f32.mxu0 0.0
    %352 = vmatmul.mubr.f32.gmra.mrb[0].mxu0 %v92
    %v353 = vpop.f32.mrb[0].mxu0
    %v354 = vadd.f32 %v285, %v353
    %v355 = vpop.f32.mrb[0].mxu0
    %356 = vdwg.mxu0
    %v357 = vmul.f32 %v168, %v261
    %v358 = vadd.f32 %v357, %v354
    %v359 = vmax.f32 %v358, 0.0
    %360 = vst [vmem:[#allocation11] sm:$0xff] %v359
    // Predicated region
    $region50: #{_lambda_.1} parent=1 // pred_check
      _
    $region51: #{_lambda_.1} parent=1 // pred_check_branch
      %362 = sbr.rel (0) target = $region53
    $region52: #{_lambda_.1} parent=1 // pred_region
      %s364 = ssub.s32 128, 128
      %365 = vsyncadd [#allocation4], %s364
      %s367 = sshll.u32 [#allocation11], 4
      %s368 = int_to_ptr.vmem [resolvable:$true] %s367
      %370 = dma.vmem_to_hbm [thread:$0]  %s368, 128, %s7, [#allocation4]
    $region53: #{_lambda_.1} parent=1 // pred_fallthru
      _
    // Predicated region
    $region54: #{_lambda_.1} parent=1 // pred_check
      _
    $region55: #{_lambda_.1} parent=1 // pred_check_branch
      %372 = sbr.rel (0) target = $region57
    $region56: #{_lambda_.1} parent=1 // pred_region
      %373 = dma.done [#allocation4], 128
    $region57: #{_lambda_.1} parent=1 // pred_fallthru
      _
    %374 = vsyncpa [#allocation3], 1
    %375 = vsyncpa [#allocation6], 1
    %376 = vsyncpa [#allocation9], 1
    %377 = vsyncpa [#allocation4], 1

</llo_original>
